<compile_context>
chip_gen: v7x
topology: tpu7x:2x2x1
jax: 0.10.0
libtpu: 0.0.40
codegen_flags: <defaults>
</compile_context>

<pallas_src>
import math

import jax
import jax.numpy as jnp
from jax.experimental import pallas as pl
from jax.experimental.pallas import tpu as pltpu

_LANE = 128                      # TPU lane width (last dim of a vreg)
_TL_MAX = 2048                   # length-tile cap (>=512 already ~85% HBM roofline)
_TB_MAX = 8                      # max batches folded per grid step (static unroll)
_STEP_TARGET_BYTES = 512 * 1024  # aim for >= ~0.5 MiB of I/O per grid step


def _round_up(x, m):
    return ((x + m - 1) // m) * m


def _vmem_budget_bytes():
    """Conservative VMEM budget for double-buffered tiles (fits default scoped limits)."""
    try:
        cap = pltpu.get_tpu_info().vmem_capacity_bytes
    except Exception:  # interpret mode / older runtimes
        cap = 64 * 1024 * 1024
    return min(cap // 5, 12 * 1024 * 1024)


def _choose_tiles(B, U, V, L, itemsize):
    """Pick (TB, TL) and padded (Bp, Lp) so tiles are lane-dense and fit VMEM."""
    budget = _vmem_budget_bytes()
    fixed = 2 * (V * U + V) * itemsize                      # resident weight + bias
    avail = max(budget - fixed, 2 * (U + V) * _LANE * itemsize)

    # Lane-dense length tile, as large as the VMEM budget allows (double-buffered).
    Lp = _round_up(max(L, 1), _LANE)
    tl_fit = (avail // (2 * (U + V) * itemsize) // _LANE) * _LANE
    TL = min(Lp, _TL_MAX, max(_LANE, tl_fit))
    n_l = -(-Lp // TL)
    TL = _round_up(-(-Lp // n_l), _LANE)                    # even out tiles, keep lane density
    Lp = n_l * TL

    # Fatten grid steps over batch while VMEM and unroll budget allow.
    def step_io_bytes(tb):
        return tb * (U + V) * TL * itemsize

    TB = 1
    while (TB < min(B, _TB_MAX)
           and step_io_bytes(TB) < _STEP_TARGET_BYTES
           and 2 * step_io_bytes(TB + 1) <= avail):
        TB += 1
    Bp = _round_up(B, TB)
    return TB, TL, Bp, Lp


def _transposed_linear_kernel(x_ref, w_ref, b_ref, o_ref):
    # x_ref: (TB, U, TL)  w_ref: (V, U)  b_ref: (V, 1)  o_ref: (TB, V, TL)
    w = w_ref[...]
    bias = b_ref[...]
    for b in range(x_ref.shape[0]):                         # static unroll, TB <= 8
        y = jnp.dot(w, x_ref[b], preferred_element_type=jnp.float32)   # (V, TL) on MXU
        o_ref[b] = (y + bias).astype(o_ref.dtype)           # (V,1) broadcasts over lanes


def transposed_linear(x, weight, bias):
    """x: (..., U, L), weight: (V, U), bias: (V, 1) -> (..., V, L)."""
    *lead, U, L = x.shape
    V, U_w = weight.shape
    assert U == U_w and bias.shape == (V, 1)

    B = math.prod(lead) if lead else 1
    xb = x.reshape(B, U, L)

    itemsize = jnp.dtype(x.dtype).itemsize
    TB, TL, Bp, Lp = _choose_tiles(B, U, V, L, itemsize)

    if (Bp, Lp) != (B, L):
        xb = jnp.pad(xb, ((0, Bp - B), (0, 0), (0, Lp - L)))

    grid = (Bp // TB, Lp // TL)
    cost = pl.CostEstimate(
        flops=2 * Bp * V * U * Lp,
        transcendentals=0,
        bytes_accessed=(Bp * U * Lp + Bp * V * Lp + V * U + V) * itemsize,
    )

    out = pl.pallas_call(
        _transposed_linear_kernel,
        out_shape=jax.ShapeDtypeStruct((Bp, V, Lp), x.dtype),
        grid=grid,
        in_specs=[
            pl.BlockSpec((TB, U, TL), lambda i, j: (i, 0, j)),   # batch/length tiled x
            pl.BlockSpec((V, U), lambda i, j: (0, 0)),           # resident weight
            pl.BlockSpec((V, 1), lambda i, j: (0, 0)),           # resident bias
        ],
        out_specs=pl.BlockSpec((TB, V, TL), lambda i, j: (i, 0, j)),
        compiler_params=pltpu.CompilerParams(
            dimension_semantics=("parallel", "parallel"),        # megacore sharding on v7x
        ),
        cost_estimate=cost,
    )(xb, weight, bias)

    out = out[:B, :, :L]
    return out.reshape((*lead, V, L))


def init_params(key, d_input, d_output, dtype=jnp.float32):
    """Deterministic init matching nn.init.kaiming_uniform_(a=sqrt(5)) + uniform bias."""
    kw, kb = jax.random.split(key)
    # kaiming_uniform with a=sqrt(5) on fan_in=d_input reduces to U(-1/sqrt(fan_in), 1/sqrt(fan_in))
    bound = 1.0 / math.sqrt(d_input)
    weight = jax.random.uniform(kw, (d_output, d_input), dtype, minval=-bound, maxval=bound)
    bias = jax.random.uniform(kb, (d_output, 1), dtype, minval=-bound, maxval=bound)
    return weight, bias


if __name__ == "__main__":
    key = jax.random.PRNGKey(0)
    k_x, k_p, k_x2, k_p2 = jax.random.split(key, 4)

    # Toy shape matching CSDI-S4 usage: (batch, d_input, length).
    B, U, V, L = 2, 32, 8, 16
    x = jax.random.normal(k_x, (B, U, L), dtype=jnp.float32)
    weight, bias = init_params(k_p, d_input=U, d_output=V)

    out = jax.block_until_ready(transposed_linear(x, weight, bias))
    ref = jnp.einsum('bul,vu->bvl', x, weight) + bias
    assert out.shape == (B, V, L)
    assert jnp.allclose(out, ref, atol=1e-5, rtol=1e-5), "mismatch vs reference (case 1)"

    # Second case: L not a multiple of 128 and B not a power of two -> exercises
    # the padding + batch-blocking path.
    B2, C_IN, C_OUT, L2 = 3, 48, 24, 200
    x2 = jax.random.normal(k_x2, (B2, C_IN, L2), dtype=jnp.float32)
    w2, b2 = init_params(k_p2, d_input=C_IN, d_output=C_OUT)
    out2 = jax.block_until_ready(transposed_linear(x2, w2, b2))
    ref2 = jnp.einsum('bul,vu->bvl', x2, w2) + b2
    assert out2.shape == (B2, C_OUT, L2)
    assert jnp.allclose(out2, ref2, atol=1e-5, rtol=1e-5), "mismatch vs reference (case 2)"

    print("KERNEL_OK")
</pallas_src>

<mosaic_0001>
module attributes {stable_mosaic.version = 11 : i64} {
  func.func @_transposed_linear_kernel(%arg0: i32, %arg1: i32, %arg2: memref<2x32x128xf32, #tpu.memory_space<vmem>>, %arg3: memref<8x32xf32, #tpu.memory_space<vmem>>, %arg4: memref<8x1xf32, #tpu.memory_space<vmem>>, %arg5: memref<2x8x128xf32, #tpu.memory_space<vmem>>) attributes {dimension_semantics = [#tpu.dimension_semantics<parallel>, #tpu.dimension_semantics<parallel>], iteration_bounds = array<i64: 1, 1>, scalar_prefetch = 0 : i64, scratch_operands = 0 : i64, tpu.core_type = #tpu.core_type<tc>, window_params = [{transform_indices = @transform_0, window_bounds = array<i64: 2, 32, 128>}, {pipeline_mode = #tpu.pipeline_mode<synchronous>, transform_indices = @transform_1, window_bounds = array<i64: 8, 32>}, {pipeline_mode = #tpu.pipeline_mode<synchronous>, transform_indices = @transform_2, window_bounds = array<i64: 8, 1>}, {transform_indices = @transform_3, window_bounds = array<i64: 2, 8, 128>}]} {
    %c0 = arith.constant 0 : index
    %c0_0 = arith.constant 0 : index
    %0 = vector.load %arg3[%c0, %c0_0] : memref<8x32xf32, #tpu.memory_space<vmem>>, vector<8x32xf32>
    %c0_1 = arith.constant 0 : index
    %c0_2 = arith.constant 0 : index
    %1 = vector.load %arg4[%c0_1, %c0_2] : memref<8x1xf32, #tpu.memory_space<vmem>>, vector<8x1xf32>
    %c0_3 = arith.constant 0 : index
    %c0_4 = arith.constant 0 : index
    %c0_5 = arith.constant 0 : index
    %2 = vector.load %arg2[%c0_3, %c0_4, %c0_5] : memref<2x32x128xf32, #tpu.memory_space<vmem>>, vector<1x32x128xf32>
    %3 = vector.shape_cast %2 : vector<1x32x128xf32> to vector<32x128xf32>
    %cst = arith.constant dense<0.000000e+00> : vector<8x128xf32>
    %4 = tpu.matmul %0, %3, %cst {dimension_numbers = #tpu.dot_dimension_numbers<[1], [0], [0], [1], [0, 0, 1, 1], [], []>} : vector<8x32xf32>, vector<32x128xf32>, vector<8x128xf32> -> vector<8x128xf32>
    %5 = vector.broadcast %1 : vector<8x1xf32> to vector<8x128xf32>
    %6 = arith.addf %4, %5 : vector<8x128xf32>
    %c0_6 = arith.constant 0 : index
    %c0_7 = arith.constant 0 : index
    %c0_8 = arith.constant 0 : index
    %7 = vector.load %arg5[%c0_6, %c0_7, %c0_8] : memref<2x8x128xf32, #tpu.memory_space<vmem>>, vector<1x8x128xf32>
    %8 = vector.shape_cast %7 : vector<1x8x128xf32> to vector<8x128xf32>
    %9 = vector.shape_cast %6 : vector<8x128xf32> to vector<1x8x128xf32>
    tpu.vector_store %arg5[%c0_6, %c0_7, %c0_8], %9 {strides = array<i32>} : memref<2x8x128xf32, #tpu.memory_space<vmem>>, vector<1x8x128xf32>,
    %c1 = arith.constant 1 : index
    %c0_9 = arith.constant 0 : index
    %c0_10 = arith.constant 0 : index
    %10 = vector.load %arg2[%c1, %c0_9, %c0_10] : memref<2x32x128xf32, #tpu.memory_space<vmem>>, vector<1x32x128xf32>
    %11 = vector.shape_cast %10 : vector<1x32x128xf32> to vector<32x128xf32>
    %cst_11 = arith.constant dense<0.000000e+00> : vector<8x128xf32>
    %12 = tpu.matmul %0, %11, %cst_11 {dimension_numbers = #tpu.dot_dimension_numbers<[1], [0], [0], [1], [0, 0, 1, 1], [], []>} : vector<8x32xf32>, vector<32x128xf32>, vector<8x128xf32> -> vector<8x128xf32>
    %13 = vector.broadcast %1 : vector<8x1xf32> to vector<8x128xf32>
    %14 = arith.addf %12, %13 : vector<8x128xf32>
    %c1_12 = arith.constant 1 : index
    %c0_13 = arith.constant 0 : index
    %c0_14 = arith.constant 0 : index
    %15 = vector.load %arg5[%c1_12, %c0_13, %c0_14] : memref<2x8x128xf32, #tpu.memory_space<vmem>>, vector<1x8x128xf32>
    %16 = vector.shape_cast %15 : vector<1x8x128xf32> to vector<8x128xf32>
    %17 = vector.shape_cast %14 : vector<8x128xf32> to vector<1x8x128xf32>
    tpu.vector_store %arg5[%c1_12, %c0_13, %c0_14], %17 {strides = array<i32>} : memref<2x8x128xf32, #tpu.memory_space<vmem>>, vector<1x8x128xf32>,
    return
  }
  func.func @transform_0(%arg0: i32, %arg1: i32) -> (i32, i32, i32) {
    %c0_i32 = arith.constant 0 : i32
    %c0_i32_0 = arith.constant 0 : i32
    return %arg0, %c0_i32, %arg1 : i32, i32, i32
  }
  func.func @transform_1(%arg0: i32, %arg1: i32) -> (i32, i32) {
    %c0_i32 = arith.constant 0 : i32
    %c0_i32_0 = arith.constant 0 : i32
    %c0_i32_1 = arith.constant 0 : i32
    return %c0_i32, %c0_i32_0 : i32, i32
  }
  func.func @transform_2(%arg0: i32, %arg1: i32) -> (i32, i32) {
    %c0_i32 = arith.constant 0 : i32
    %c0_i32_0 = arith.constant 0 : i32
    %c0_i32_1 = arith.constant 0 : i32
    return %c0_i32, %c0_i32_0 : i32, i32
  }
  func.func @transform_3(%arg0: i32, %arg1: i32) -> (i32, i32, i32) {
    %c0_i32 = arith.constant 0 : i32
    %c0_i32_0 = arith.constant 0 : i32
    return %arg0, %c0_i32, %arg1 : i32, i32, i32
  }
}

</mosaic_0001>

<llo_original>
// kernel: tpu_custom_call.1
$region0: #{tpu_custom_call.1}
  #allocation0 [shape = 'u32[]', space=smem, size = 0x4, offset = 0x4, fixed_abs, tag = 'smem constant byte address 0x4 - core index']
  #allocation1 [shape = 'u32[144,128]{1,0:T(1,128)}', space=vmem, size = 0x12000, scoped, tag = 'internal scratch']
  %s0 = inlined_call_operand.hbm [shape: f32[2,32,128], index: 0, kind: input, shape index: {}]
  %s1 = inlined_call_operand.vmem [shape: f32[8,32], index: 1, kind: input, shape index: {}]
  %s2 = inlined_call_operand.vmem [shape: f32[8,1], index: 2, kind: input, shape index: {}]
  %s3 = inlined_call_operand.hbm [shape: f32[2,8,128], index: 3, kind: output, shape index: {}]
  %s4 = sld [smem:[#allocation0]]
  $region26: #{tpu_custom_call.1} parent=0
    _
  %s6 = ssub.s32 1, %s4
  %s7 = scalar_select 0, %s6, %s4
  $region1: #{tpu_custom_call.1} parent=0
    #allocation2 [shape = 'u8[32768]{0}', space=vmem, size = 0x8000, scoped, tag = 'input window, operand 0, single buffered']
    #allocation3 [shape = 's32[1]{0}', space=sflag, size = 0x4, scoped, tag = 'scoped memory for tpu_custom_call.1']
    #allocation4 [shape = 's32[1]{0}', space=sflag, size = 0x4, scoped, tag = 'scoped memory for tpu_custom_call.1']
    #allocation5 [shape = 'u8[8192]{0}', space=vmem, size = 0x2000, scoped, tag = 'output window, operand 0, single buffered']
    %8 = vsyncpa [#allocation3], 0
    %9 = vsyncpa [#allocation4], 0
    // Predicated region
    $region2: #{tpu_custom_call.1} parent=1 // pred_check
      _
    $region3: #{tpu_custom_call.1} parent=1 // pred_check_branch
      %11 = sbr.rel (0) target = $region5
    $region4: #{tpu_custom_call.1} parent=1 // pred_region
      %s13 = ssub.s32 1024, 1024
      %14 = vsyncadd [#allocation3], %s13
      %s15 = sshll.u32 [#allocation2], 4
      %s16 = int_to_ptr.vmem [resolvable:$true] %s15
      %21 = dma.hbm_to_vmem [thread:$0]  %s0, 1024, %s16, [#allocation3], 128, 128, 8
    $region5: #{tpu_custom_call.1} parent=1 // pred_fallthru
      _
    // Predicated region
    $region6: #{tpu_custom_call.1} parent=1 // pred_check
      _
    $region7: #{tpu_custom_call.1} parent=1 // pred_check_branch
      %23 = sbr.rel (0) target = $region9
    $region8: #{tpu_custom_call.1} parent=1 // pred_region
      _
    $region9: #{tpu_custom_call.1} parent=1 // pred_fallthru
      _
    // Predicated region
    $region10: #{tpu_custom_call.1} parent=1 // pred_check
      _
    $region11: #{tpu_custom_call.1} parent=1 // pred_check_branch
      %25 = sbr.rel (0) target = $region13
    $region12: #{tpu_custom_call.1} parent=1 // pred_region
      _
    $region13: #{tpu_custom_call.1} parent=1 // pred_fallthru
      _
    // Predicated region
    $region14: #{tpu_custom_call.1} parent=1 // pred_check
      _
    $region15: #{tpu_custom_call.1} parent=1 // pred_check_branch
      %27 = sbr.rel (0) target = $region17
    $region16: #{tpu_custom_call.1} parent=1 // pred_region
      %28 = dma.done [#allocation3], 1024
    $region17: #{tpu_custom_call.1} parent=1 // pred_fallthru
      _
    %v29 = vld [vmem:[%s1] sm:$0xff]
    %v30 = vld [vmem:[%s2] sm:$0xff]
    %v31 = vld [vmem:[#allocation2] sm:$0xff]
    %v32 = vld [vmem:[#allocation2 + $0x8] sm:$0xff]
    %v33 = vld [vmem:[#allocation2 + $0x10] sm:$0xff]
    %v34 = vld [vmem:[#allocation2 + $0x18] sm:$0xff]
    %36 = vset.pattern.permute.xlu0 0
    %37 = vperm.xlu0 %36, %v30
    %v38 = vpop.permute.xlu0 %37
    %vm40 = vcmask 261120
    %v42 = vsel %vm40, %v29, 0
    %44 = vmatprep.subr.mxu0 0.0
    %45 = vmatpush1.msra.mxu0 %v31
    %46 = vmatprep.subr.mxu0 0.0
    %47 = vmatpush1.msra.mxu0 %v32
    %48 = vmatprep.subr.mxu0 0.0
    %49 = vmatpush1.msra.mxu0 %v33
    %50 = vmatprep.subr.mxu0 0.0
    %51 = vmatpush1.msra.mxu0 %v34
    %52 = vmatprep.subr.mxu0 0.0
    %53 = vmatpush1.msra.mxu0 0.0
    %54 = vmatprep.subr.mxu0 0.0
    %55 = vmatpush1.msra.mxu0 0.0
    %56 = vmatprep.subr.mxu0 0.0
    %57 = vmatpush1.msra.mxu0 0.0
    %58 = vmatprep.subr.mxu0 0.0
    %59 = vmatpush1.msra.mxu0 0.0
    %60 = vmatprep.subr.mxu0 0.0
    %61 = vmatpush1.msra.mxu0 0.0
    %62 = vmatprep.subr.mxu0 0.0
    %63 = vmatpush1.msra.mxu0 0.0
    %64 = vmatprep.subr.mxu0 0.0
    %65 = vmatpush1.msra.mxu0 0.0
    %66 = vmatprep.subr.mxu0 0.0
    %67 = vmatpush1.msra.mxu0 0.0
    %68 = vmatprep.subr.mxu0 0.0
    %69 = vmatpush1.msra.mxu0 0.0
    %70 = vmatprep.subr.mxu0 0.0
    %71 = vmatpush1.msra.mxu0 0.0
    %72 = vmatprep.subr.mxu0 0.0
    %73 = vmatpush1.msra.mxu0 0.0
    %74 = vmatprep.subr.mxu0 0.0
    %75 = vmatpush1.msra.mxu0 0.0
    %76 = vmatprep.subr.mxu0 0.0
    %77 = vmatpush1.msra.mxu0 0.0
    %78 = vmatprep.subr.mxu0 0.0
    %79 = vmatpush1.msra.mxu0 0.0
    %80 = vmatprep.subr.mxu0 0.0
    %81 = vmatpush1.msra.mxu0 0.0
    %82 = vmatprep.subr.mxu0 0.0
    %83 = vmatpush1.msra.mxu0 0.0
    %84 = vmatprep.subr.mxu0 0.0
    %85 = vmatpush1.msra.mxu0 0.0
    %86 = vmatprep.subr.mxu0 0.0
    %87 = vmatpush1.msra.mxu0 0.0
    %88 = vmatprep.subr.mxu0 0.0
    %89 = vmatpush1.msra.mxu0 0.0
    %90 = vmatprep.subr.mxu0 0.0
    %91 = vmatpush1.msra.mxu0 0.0
    %92 = vmatprep.subr.mxu0 0.0
    %93 = vmatpush1.msra.mxu0 0.0
    %94 = vmatprep.subr.mxu0 0.0
    %95 = vmatpush1.msra.mxu0 0.0
    %96 = vmatprep.subr.mxu0 0.0
    %97 = vmatpush1.msra.mxu0 0.0
    %98 = vmatprep.subr.mxu0 0.0
    %99 = vmatpush1.msra.mxu0 0.0
    %100 = vmatprep.subr.mxu0 0.0
    %101 = vmatpush1.msra.mxu0 0.0
    %102 = vmatprep.subr.mxu0 0.0
    %103 = vmatpush1.msra.mxu0 0.0
    %104 = vmatprep.subr.mxu0 0.0
    %105 = vmatpush1.msra.mxu0 0.0
    %106 = vmatprep.subr.mxu0 0.0
    %107 = vmatpush1.msra.mxu0 0.0
    %108 = vmatprep.mubr.f32.mxu0 0.0
    %109 = vmatmul.mubr.f32.gmra.mrb[0].mxu0 %v42
    %v110 = vpop.f32.mrb[0].mxu0
    %v111 = vadd.f32 %v38, %v110
    %v112 = vpop.f32.mrb[0].mxu0
    %113 = vdwg.mxu0
    %114 = vst [vmem:[#allocation5] sm:$0xff] %v111
    %s115 = scalar_lea.vmem [#allocation2], 32
    %v116 = vld [vmem:[%s115] sm:$0xff]
    %v117 = vld [vmem:[%s115 + $0x8] sm:$0xff]
    %v118 = vld [vmem:[%s115 + $0x10] sm:$0xff]
    %v119 = vld [vmem:[%s115 + $0x18] sm:$0xff]
    %120 = vmatprep.subr.mxu0 0.0
    %121 = vmatpush1.msra.mxu0 %v116
    %122 = vmatprep.subr.mxu0 0.0
    %123 = vmatpush1.msra.mxu0 %v117
    %124 = vmatprep.subr.mxu0 0.0
    %125 = vmatpush1.msra.mxu0 %v118
    %126 = vmatprep.subr.mxu0 0.0
    %127 = vmatpush1.msra.mxu0 %v119
    %128 = vmatprep.subr.mxu0 0.0
    %129 = vmatpush1.msra.mxu0 0.0
    %130 = vmatprep.subr.mxu0 0.0
    %131 = vmatpush1.msra.mxu0 0.0
    %132 = vmatprep.subr.mxu0 0.0
    %133 = vmatpush1.msra.mxu0 0.0
    %134 = vmatprep.subr.mxu0 0.0
    %135 = vmatpush1.msra.mxu0 0.0
    %136 = vmatprep.subr.mxu0 0.0
    %137 = vmatpush1.msra.mxu0 0.0
    %138 = vmatprep.subr.mxu0 0.0
    %139 = vmatpush1.msra.mxu0 0.0
    %140 = vmatprep.subr.mxu0 0.0
    %141 = vmatpush1.msra.mxu0 0.0
    %142 = vmatprep.subr.mxu0 0.0
    %143 = vmatpush1.msra.mxu0 0.0
    %144 = vmatprep.subr.mxu0 0.0
    %145 = vmatpush1.msra.mxu0 0.0
    %146 = vmatprep.subr.mxu0 0.0
    %147 = vmatpush1.msra.mxu0 0.0
    %148 = vmatprep.subr.mxu0 0.0
    %149 = vmatpush1.msra.mxu0 0.0
    %150 = vmatprep.subr.mxu0 0.0
    %151 = vmatpush1.msra.mxu0 0.0
    %152 = vmatprep.subr.mxu0 0.0
    %153 = vmatpush1.msra.mxu0 0.0
    %154 = vmatprep.subr.mxu0 0.0
    %155 = vmatpush1.msra.mxu0 0.0
    %156 = vmatprep.subr.mxu0 0.0
    %157 = vmatpush1.msra.mxu0 0.0
    %158 = vmatprep.subr.mxu0 0.0
    %159 = vmatpush1.msra.mxu0 0.0
    %160 = vmatprep.subr.mxu0 0.0
    %161 = vmatpush1.msra.mxu0 0.0
    %162 = vmatprep.subr.mxu0 0.0
    %163 = vmatpush1.msra.mxu0 0.0
    %164 = vmatprep.subr.mxu0 0.0
    %165 = vmatpush1.msra.mxu0 0.0
    %166 = vmatprep.subr.mxu0 0.0
    %167 = vmatpush1.msra.mxu0 0.0
    %168 = vmatprep.subr.mxu0 0.0
    %169 = vmatpush1.msra.mxu0 0.0
    %170 = vmatprep.subr.mxu0 0.0
    %171 = vmatpush1.msra.mxu0 0.0
    %172 = vmatprep.subr.mxu0 0.0
    %173 = vmatpush1.msra.mxu0 0.0
    %174 = vmatprep.subr.mxu0 0.0
    %175 = vmatpush1.msra.mxu0 0.0
    %176 = vmatprep.subr.mxu0 0.0
    %177 = vmatpush1.msra.mxu0 0.0
    %178 = vmatprep.subr.mxu0 0.0
    %179 = vmatpush1.msra.mxu0 0.0
    %180 = vmatprep.subr.mxu0 0.0
    %181 = vmatpush1.msra.mxu0 0.0
    %182 = vmatprep.subr.mxu0 0.0
    %183 = vmatpush1.msra.mxu0 0.0
    %184 = vmatprep.mubr.f32.mxu0 0.0
    %185 = vmatmul.mubr.f32.gmra.mrb[0].mxu0 %v42
    %v186 = vpop.f32.mrb[0].mxu0
    %v187 = vadd.f32 %v38, %v186
    %v188 = vpop.f32.mrb[0].mxu0
    %189 = vdwg.mxu0
    %s190 = scalar_lea.vmem [#allocation5], 8
    %191 = vst [vmem:[%s190] sm:$0xff] %v187
    // Predicated region
    $region18: #{tpu_custom_call.1} parent=1 // pred_check
      _
    $region19: #{tpu_custom_call.1} parent=1 // pred_check_branch
      %193 = sbr.rel (0) target = $region21
    $region20: #{tpu_custom_call.1} parent=1 // pred_region
      %s195 = ssub.s32 256, 256
      %196 = vsyncadd [#allocation4], %s195
      %s197 = sshll.u32 [#allocation5], 4
      %s198 = int_to_ptr.vmem [resolvable:$true] %s197
      %203 = dma.vmem_to_hbm [thread:$0]  %s198, 256, %s3, [#allocation4], 128, 128, 8
    $region21: #{tpu_custom_call.1} parent=1 // pred_fallthru
      _
    // Predicated region
    $region22: #{tpu_custom_call.1} parent=1 // pred_check
      _
    $region23: #{tpu_custom_call.1} parent=1 // pred_check_branch
      %205 = sbr.rel (0) target = $region25
    $region24: #{tpu_custom_call.1} parent=1 // pred_region
      %206 = dma.done [#allocation4], 256
    $region25: #{tpu_custom_call.1} parent=1 // pred_fallthru
      _
    %207 = vsyncpa [#allocation3], 1
    %208 = vsyncpa [#allocation4], 1

</llo_original>
